<compile_context>
chip_gen: v7x
topology: tpu7x:2x2x1
jax: 0.10.0
libtpu: 0.0.40
codegen_flags: <defaults>
</compile_context>

<pallas_src>
import functools

import jax
import jax.numpy as jnp
from jax.experimental import pallas as pl
from jax.experimental.pallas import tpu as pltpu


def _round_up(x, m):
    return ((x + m - 1) // m) * m


def _choose_tb(B, tb):
    """Batch tile: multiple of 16 (bf16 row pack); >=2 grid steps when possible."""
    B16 = _round_up(max(B, 1), 16)
    tb = max(16, _round_up(tb, 16))
    n_tiles = max(1, pl.cdiv(B16, tb))
    if n_tiles == 1 and B16 >= 32:
        # Give v7x's 2 TensorCores something to shard; harmless on 1-TC chips.
        n_tiles = 2
    return _round_up(pl.cdiv(B16, n_tiles), 16)


def _actor_kernel(x_ref, w1_ref, b1_ref, w2_ref, b2_ref, wmu_ref, bmu_ref,
                  scale_ref, bias_ref, out_ref):
    # x tile arrives as f32; cast to bf16 in-kernel for the MXU.
    x = x_ref[...].astype(jnp.bfloat16)

    # fc1 + ReLU  (bf16 MXU operands, f32 accumulate, f32 VPU math)
    h1 = jnp.dot(x, w1_ref[...], preferred_element_type=jnp.float32) + b1_ref[...]
    h1 = jnp.maximum(h1, 0.0)

    # fc2 + ReLU
    h2 = jnp.dot(h1.astype(jnp.bfloat16), w2_ref[...],
                 preferred_element_type=jnp.float32) + b2_ref[...]
    h2 = jnp.maximum(h2, 0.0)

    # fc_mu + tanh (columns lane-padded to 128; padding weights/biases are zero)
    mu = jnp.dot(h2.astype(jnp.bfloat16), wmu_ref[...],
                 preferred_element_type=jnp.float32) + bmu_ref[...]
    mu = jnp.tanh(mu)

    # action rescaling with lane-padded (1, A_pad) scale/bias operands
    out_ref[...] = (mu * scale_ref[...] + bias_ref[...]).astype(out_ref.dtype)


def prepare_actor_params(params):
    """One-time prep (call once, reuse): pad fc_mu to 128 lanes, cast to bf16/f32."""
    w1, b1 = params["w1"], params["b1"]
    w2, b2 = params["w2"], params["b2"]
    wmu, bmu = params["w_mu"], params["b_mu"]
    H = w1.shape[1]
    A = wmu.shape[1]
    A_pad = _round_up(max(A, 128), 128)

    # action_scale / action_bias may be scalar or per-action-dim buffers.
    scale = jnp.broadcast_to(
        jnp.asarray(params["action_scale"], jnp.float32).reshape(-1), (A,))
    bias = jnp.broadcast_to(
        jnp.asarray(params["action_bias"], jnp.float32).reshape(-1), (A,))

    return {
        "w1": w1.astype(jnp.bfloat16),
        "b1": b1.reshape(1, H).astype(jnp.float32),
        "w2": w2.astype(jnp.bfloat16),
        "b2": b2.reshape(1, H).astype(jnp.float32),
        "w_mu": jnp.zeros((H, A_pad), jnp.bfloat16).at[:, :A].set(
            wmu.astype(jnp.bfloat16)),
        "b_mu": jnp.zeros((1, A_pad), jnp.float32).at[0, :A].set(
            bmu.astype(jnp.float32)),
        "scale": jnp.zeros((1, A_pad), jnp.float32).at[0, :A].set(scale),
        "bias": jnp.zeros((1, A_pad), jnp.float32).at[0, :A].set(bias),
    }


def actor_forward(x, prepped, *, act_dim, tb=256):
    """x: (B, obs_dim) f32.  prepped: output of prepare_actor_params."""
    B, obs_dim = x.shape
    H = prepped["w1"].shape[1]
    A_pad = prepped["w_mu"].shape[1]
    A = act_dim

    TB = _choose_tb(B, tb)
    B_pad = TB * pl.cdiv(B, TB)
    x_p = jnp.pad(x, ((0, B_pad - B), (0, 0))) if B_pad != B else x

    resident = lambda i: (0, 0)   # weights/biases: same block for every grid step

    out = pl.pallas_call(
        _actor_kernel,
        out_shape=jax.ShapeDtypeStruct((B_pad, A_pad), jnp.float32),
        grid=(B_pad // TB,),
        in_specs=[
            pl.BlockSpec((TB, obs_dim), lambda i: (i, 0)),   # x tile (pipelined)
            pl.BlockSpec((obs_dim, H), resident),            # w1
            pl.BlockSpec((1, H), resident),                  # b1
            pl.BlockSpec((H, H), resident),                  # w2
            pl.BlockSpec((1, H), resident),                  # b2
            pl.BlockSpec((H, A_pad), resident),              # w_mu (lane-padded)
            pl.BlockSpec((1, A_pad), resident),              # b_mu (lane-padded)
            pl.BlockSpec((1, A_pad), resident),              # action_scale
            pl.BlockSpec((1, A_pad), resident),              # action_bias
        ],
        out_specs=pl.BlockSpec((TB, A_pad), lambda i: (i, 0)),
        compiler_params=pltpu.CompilerParams(
            dimension_semantics=("parallel",)),              # 2-TC sharding on v7x
    )(x_p, prepped["w1"], prepped["b1"], prepped["w2"], prepped["b2"],
      prepped["w_mu"], prepped["b_mu"], prepped["scale"], prepped["bias"])

    # TODO(synk): latency-critical callers can consume the padded (B_pad, A_pad)
    # buffer directly and skip this slice launch.
    return out[:B, :A]


def init_actor_params(key, obs_dim, act_dim, n_hidden=256):
    """Deterministic synthetic init (PyTorch-Linear-like uniform fan-in bounds)."""
    ks = jax.random.split(key, 6)

    def lin(kw, kb, fan_in, fan_out):
        bound = 1.0 / jnp.sqrt(jnp.asarray(fan_in, jnp.float32))
        w = jax.random.uniform(kw, (fan_in, fan_out), jnp.float32, -bound, bound)
        b = jax.random.uniform(kb, (fan_out,), jnp.float32, -bound, bound)
        return w, b

    w1, b1 = lin(ks[0], ks[1], obs_dim, n_hidden)
    w2, b2 = lin(ks[2], ks[3], n_hidden, n_hidden)
    w_mu, b_mu = lin(ks[4], ks[5], n_hidden, act_dim)

    # synthetic action space: high = 1.0, low = -1.0  =>  scale = 1.0, bias = 0.0
    action_high, action_low = 1.0, -1.0
    return {
        "w1": w1, "b1": b1,
        "w2": w2, "b2": b2,
        "w_mu": w_mu, "b_mu": b_mu,
        "action_scale": (action_high - action_low) / 2.0,
        "action_bias": (action_high + action_low) / 2.0,
    }


def actor_forward_ref_f32(x, p):
    """Pure f32 reference (matches the PyTorch module's math)."""
    h1 = jnp.maximum(x @ p["w1"] + p["b1"], 0.0)
    h2 = jnp.maximum(h1 @ p["w2"] + p["b2"], 0.0)
    mu = jnp.tanh(h2 @ p["w_mu"] + p["b_mu"])
    return mu * p["action_scale"] + p["action_bias"]


def actor_forward_ref_bf16(x, p):
    """Reference with the same bf16-operand / f32-accumulate scheme as the kernel."""
    bf = jnp.bfloat16
    h1 = jnp.dot(x.astype(bf), p["w1"].astype(bf),
                 preferred_element_type=jnp.float32) + p["b1"]
    h1 = jnp.maximum(h1, 0.0)
    h2 = jnp.dot(h1.astype(bf), p["w2"].astype(bf),
                 preferred_element_type=jnp.float32) + p["b2"]
    h2 = jnp.maximum(h2, 0.0)
    mu = jnp.tanh(jnp.dot(h2.astype(bf), p["w_mu"].astype(bf),
                          preferred_element_type=jnp.float32) + p["b_mu"])
    return mu * p["action_scale"] + p["action_bias"]


if __name__ == "__main__":
    key = jax.random.PRNGKey(0)
    k_x, k_p = jax.random.split(key)

    # Small shapes; batch chosen to exercise the grid + row padding (200 -> 224,
    # 2 batch tiles of 112 rows).
    batch, obs_dim, act_dim, n_hidden = 200, 16, 4, 256
    x = jax.random.normal(k_x, (batch, obs_dim), jnp.float32)
    params = init_actor_params(k_p, obs_dim, act_dim, n_hidden=n_hidden)

    # One-time weight prep (padding / bf16 casts) — out of the per-call hot path.
    prepped = prepare_actor_params(params)

    fwd = jax.jit(functools.partial(actor_forward, act_dim=act_dim, tb=128))
    out = jax.block_until_ready(fwd(x, prepped))
    assert out.shape == (batch, act_dim)

    # Tight check against a bf16-matched reference (same matmul dtypes).
    ref_bf16 = actor_forward_ref_bf16(x, params)
    assert jnp.allclose(out, ref_bf16, atol=2e-3, rtol=2e-3), \
        "mismatch vs bf16-matched JAX reference"

    # Loose check against the pure-f32 reference (bf16 MXU operand rounding).
    ref_f32 = actor_forward_ref_f32(x, params)
    assert jnp.allclose(out, ref_f32, atol=5e-2, rtol=5e-2), \
        "mismatch vs f32 JAX reference"

    print("KERNEL_OK")
</pallas_src>

<mosaic_0001>
module attributes {stable_mosaic.version = 11 : i64} {
  func.func @_actor_kernel(%arg0: i32, %arg1: memref<112x16xf32, #tpu.memory_space<vmem>>, %arg2: memref<16x256xbf16, #tpu.memory_space<vmem>>, %arg3: memref<1x256xf32, #tpu.memory_space<vmem>>, %arg4: memref<256x256xbf16, #tpu.memory_space<vmem>>, %arg5: memref<1x256xf32, #tpu.memory_space<vmem>>, %arg6: memref<256x128xbf16, #tpu.memory_space<vmem>>, %arg7: memref<1x128xf32, #tpu.memory_space<vmem>>, %arg8: memref<1x128xf32, #tpu.memory_space<vmem>>, %arg9: memref<1x128xf32, #tpu.memory_space<vmem>>, %arg10: memref<112x128xf32, #tpu.memory_space<vmem>>) attributes {dimension_semantics = [#tpu.dimension_semantics<parallel>], iteration_bounds = array<i64: 2>, scalar_prefetch = 0 : i64, scratch_operands = 0 : i64, tpu.core_type = #tpu.core_type<tc>, window_params = [{transform_indices = @transform_0, window_bounds = array<i64: 112, 16>}, {pipeline_mode = #tpu.pipeline_mode<synchronous>, transform_indices = @transform_1, window_bounds = array<i64: 16, 256>}, {pipeline_mode = #tpu.pipeline_mode<synchronous>, transform_indices = @transform_2, window_bounds = array<i64: 1, 256>}, {pipeline_mode = #tpu.pipeline_mode<synchronous>, transform_indices = @transform_3, window_bounds = array<i64: 256, 256>}, {pipeline_mode = #tpu.pipeline_mode<synchronous>, transform_indices = @transform_4, window_bounds = array<i64: 1, 256>}, {pipeline_mode = #tpu.pipeline_mode<synchronous>, transform_indices = @transform_5, window_bounds = array<i64: 256, 128>}, {pipeline_mode = #tpu.pipeline_mode<synchronous>, transform_indices = @transform_6, window_bounds = array<i64: 1, 128>}, {pipeline_mode = #tpu.pipeline_mode<synchronous>, transform_indices = @transform_7, window_bounds = array<i64: 1, 128>}, {pipeline_mode = #tpu.pipeline_mode<synchronous>, transform_indices = @transform_8, window_bounds = array<i64: 1, 128>}, {transform_indices = @transform_9, window_bounds = array<i64: 112, 128>}]} {
    %c0 = arith.constant 0 : index
    %c0_0 = arith.constant 0 : index
    %0 = vector.load %arg1[%c0, %c0_0] : memref<112x16xf32, #tpu.memory_space<vmem>>, vector<112x16xf32>
    %1 = arith.truncf %0 : vector<112x16xf32> to vector<112x16xbf16>
    %c0_1 = arith.constant 0 : index
    %c0_2 = arith.constant 0 : index
    %2 = vector.load %arg2[%c0_1, %c0_2] : memref<16x256xbf16, #tpu.memory_space<vmem>>, vector<16x256xbf16>
    %cst = arith.constant dense<0.000000e+00> : vector<112x256xf32>
    %3 = tpu.matmul %1, %2, %cst {dimension_numbers = #tpu.dot_dimension_numbers<[1], [0], [0], [1], [0, 0, 1, 1], [], []>} : vector<112x16xbf16>, vector<16x256xbf16>, vector<112x256xf32> -> vector<112x256xf32>
    %c0_3 = arith.constant 0 : index
    %c0_4 = arith.constant 0 : index
    %4 = vector.load %arg3[%c0_3, %c0_4] : memref<1x256xf32, #tpu.memory_space<vmem>>, vector<1x256xf32>
    %5 = vector.broadcast %4 : vector<1x256xf32> to vector<112x256xf32>
    %6 = arith.addf %3, %5 : vector<112x256xf32>
    %cst_5 = arith.constant 0.000000e+00 : f32
    %7 = vector.broadcast %cst_5 : f32 to vector<112x256xf32>
    %8 = arith.maximumf %6, %7 : vector<112x256xf32>
    %9 = arith.truncf %8 : vector<112x256xf32> to vector<112x256xbf16>
    %c0_6 = arith.constant 0 : index
    %c0_7 = arith.constant 0 : index
    %10 = vector.load %arg4[%c0_6, %c0_7] : memref<256x256xbf16, #tpu.memory_space<vmem>>, vector<256x256xbf16>
    %cst_8 = arith.constant dense<0.000000e+00> : vector<112x256xf32>
    %11 = tpu.matmul %9, %10, %cst_8 {dimension_numbers = #tpu.dot_dimension_numbers<[1], [0], [0], [1], [0, 0, 1, 1], [], []>} : vector<112x256xbf16>, vector<256x256xbf16>, vector<112x256xf32> -> vector<112x256xf32>
    %c0_9 = arith.constant 0 : index
    %c0_10 = arith.constant 0 : index
    %12 = vector.load %arg5[%c0_9, %c0_10] : memref<1x256xf32, #tpu.memory_space<vmem>>, vector<1x256xf32>
    %13 = vector.broadcast %12 : vector<1x256xf32> to vector<112x256xf32>
    %14 = arith.addf %11, %13 : vector<112x256xf32>
    %cst_11 = arith.constant 0.000000e+00 : f32
    %15 = vector.broadcast %cst_11 : f32 to vector<112x256xf32>
    %16 = arith.maximumf %14, %15 : vector<112x256xf32>
    %17 = arith.truncf %16 : vector<112x256xf32> to vector<112x256xbf16>
    %c0_12 = arith.constant 0 : index
    %c0_13 = arith.constant 0 : index
    %18 = vector.load %arg6[%c0_12, %c0_13] : memref<256x128xbf16, #tpu.memory_space<vmem>>, vector<256x128xbf16>
    %cst_14 = arith.constant dense<0.000000e+00> : vector<112x128xf32>
    %19 = tpu.matmul %17, %18, %cst_14 {dimension_numbers = #tpu.dot_dimension_numbers<[1], [0], [0], [1], [0, 0, 1, 1], [], []>} : vector<112x256xbf16>, vector<256x128xbf16>, vector<112x128xf32> -> vector<112x128xf32>
    %c0_15 = arith.constant 0 : index
    %c0_16 = arith.constant 0 : index
    %20 = vector.load %arg7[%c0_15, %c0_16] : memref<1x128xf32, #tpu.memory_space<vmem>>, vector<1x128xf32>
    %21 = vector.broadcast %20 : vector<1x128xf32> to vector<112x128xf32>
    %22 = arith.addf %19, %21 : vector<112x128xf32>
    %23 = math.tanh %22 : vector<112x128xf32>
    %c0_17 = arith.constant 0 : index
    %c0_18 = arith.constant 0 : index
    %24 = vector.load %arg8[%c0_17, %c0_18] : memref<1x128xf32, #tpu.memory_space<vmem>>, vector<1x128xf32>
    %25 = vector.broadcast %24 : vector<1x128xf32> to vector<112x128xf32>
    %26 = arith.mulf %23, %25 : vector<112x128xf32>
    %c0_19 = arith.constant 0 : index
    %c0_20 = arith.constant 0 : index
    %27 = vector.load %arg9[%c0_19, %c0_20] : memref<1x128xf32, #tpu.memory_space<vmem>>, vector<1x128xf32>
    %28 = vector.broadcast %27 : vector<1x128xf32> to vector<112x128xf32>
    %29 = arith.addf %26, %28 : vector<112x128xf32>
    %c0_21 = arith.constant 0 : index
    %c0_22 = arith.constant 0 : index
    %30 = vector.load %arg10[%c0_21, %c0_22] : memref<112x128xf32, #tpu.memory_space<vmem>>, vector<112x128xf32>
    tpu.vector_store %arg10[%c0_21, %c0_22], %29 {strides = array<i32>} : memref<112x128xf32, #tpu.memory_space<vmem>>, vector<112x128xf32>,
    return
  }
  func.func @transform_0(%arg0: i32) -> (i32, i32) {
    %c0_i32 = arith.constant 0 : i32
    %c0_i32_0 = arith.constant 0 : i32
    return %arg0, %c0_i32 : i32, i32
  }
  func.func @transform_1(%arg0: i32) -> (i32, i32) {
    %c0_i32 = arith.constant 0 : i32
    %c0_i32_0 = arith.constant 0 : i32
    %c0_i32_1 = arith.constant 0 : i32
    return %c0_i32, %c0_i32_0 : i32, i32
  }
  func.func @transform_2(%arg0: i32) -> (i32, i32) {
    %c0_i32 = arith.constant 0 : i32
    %c0_i32_0 = arith.constant 0 : i32
    %c0_i32_1 = arith.constant 0 : i32
    return %c0_i32, %c0_i32_0 : i32, i32
  }
  func.func @transform_3(%arg0: i32) -> (i32, i32) {
    %c0_i32 = arith.constant 0 : i32
    %c0_i32_0 = arith.constant 0 : i32
    %c0_i32_1 = arith.constant 0 : i32
    return %c0_i32, %c0_i32_0 : i32, i32
  }
  func.func @transform_4(%arg0: i32) -> (i32, i32) {
    %c0_i32 = arith.constant 0 : i32
    %c0_i32_0 = arith.constant 0 : i32
    %c0_i32_1 = arith.constant 0 : i32
    return %c0_i32, %c0_i32_0 : i32, i32
  }
  func.func @transform_5(%arg0: i32) -> (i32, i32) {
    %c0_i32 = arith.constant 0 : i32
    %c0_i32_0 = arith.constant 0 : i32
    %c0_i32_1 = arith.constant 0 : i32
    return %c0_i32, %c0_i32_0 : i32, i32
  }
  func.func @transform_6(%arg0: i32) -> (i32, i32) {
    %c0_i32 = arith.constant 0 : i32
    %c0_i32_0 = arith.constant 0 : i32
    %c0_i32_1 = arith.constant 0 : i32
    return %c0_i32, %c0_i32_0 : i32, i32
  }
  func.func @transform_7(%arg0: i32) -> (i32, i32) {
    %c0_i32 = arith.constant 0 : i32
    %c0_i32_0 = arith.constant 0 : i32
    %c0_i32_1 = arith.constant 0 : i32
    return %c0_i32, %c0_i32_0 : i32, i32
  }
  func.func @transform_8(%arg0: i32) -> (i32, i32) {
    %c0_i32 = arith.constant 0 : i32
    %c0_i32_0 = arith.constant 0 : i32
    %c0_i32_1 = arith.constant 0 : i32
    return %c0_i32, %c0_i32_0 : i32, i32
  }
  func.func @transform_9(%arg0: i32) -> (i32, i32) {
    %c0_i32 = arith.constant 0 : i32
    %c0_i32_0 = arith.constant 0 : i32
    return %arg0, %c0_i32 : i32, i32
  }
}

</mosaic_0001>

<llo_original>
// kernel: actor_forward.1
$region0: #{actor_forward.1}
  #allocation0 [shape = 'u32[]', space=smem, size = 0x4, offset = 0x4, fixed_abs, tag = 'smem constant byte address 0x4 - core index']
  #allocation1 [shape = 'u32[144,128]{1,0:T(1,128)}', space=vmem, size = 0x12000, scoped, tag = 'internal scratch']
  %s0 = inlined_call_operand.vmem [shape: f32[224,16], index: 0, kind: input, shape index: {}]
  %s1 = inlined_call_operand.vmem [shape: bf16[16,256], index: 1, kind: input, shape index: {}]
  %s2 = inlined_call_operand.vmem [shape: f32[1,256], index: 2, kind: input, shape index: {}]
  %s3 = inlined_call_operand.vmem [shape: bf16[256,256], index: 3, kind: input, shape index: {}]
  %s4 = inlined_call_operand.vmem [shape: f32[1,256], index: 4, kind: input, shape index: {}]
  %s5 = inlined_call_operand.vmem [shape: bf16[256,128], index: 5, kind: input, shape index: {}]
  %s6 = inlined_call_operand.vmem [shape: f32[1,128], index: 6, kind: input, shape index: {}]
  %s7 = inlined_call_operand.vmem [shape: f32[1,128], index: 7, kind: input, shape index: {}]
  %s8 = inlined_call_operand.vmem [shape: f32[1,128], index: 8, kind: input, shape index: {}]
  %s9 = inlined_call_operand.vmem [shape: f32[224,128], index: 9, kind: output, shape index: {}]
  %s10 = sld [smem:[#allocation0]]
  $region69: #{actor_forward.1} parent=0
    _
  %s12 = ssub.s32 1, %s10
  %s13 = scalar_select 0, %s12, %s10
  loop: start=0, step=1, limit=4
  $region2: #{actor_forward.1} parent=0 // loop_pre_header
    _
  $region3: #{actor_forward.1} parent=0 // loop_header
    %s15 = sphi 0, %s19
    %p16 = scmp.ge.s32.totalorder %s15, 4
    %s25 = sphi 0, %s27
    %s28 = sphi 0, %s25
    %s29 = sphi 0, %s28
    %s45 = sphi 0, %s29
    %s49 = sphi 0, %s49
    %s51 = sphi 0, %s49
    %s52 = sphi 0, %s51
    %s66 = sphi 0, %s52
    %s70 = sphi 0, %s70
    %s72 = sphi 0, %s70
    %s73 = sphi 0, %s72
    %s87 = sphi 0, %s73
    %s91 = sphi 0, %s91
    %s93 = sphi 0, %s91
    %s94 = sphi 0, %s93
    %s108 = sphi 0, %s94
    %s112 = sphi 0, %s112
    %s114 = sphi 0, %s112
    %s115 = sphi 0, %s114
    %s129 = sphi 0, %s115
    %s133 = sphi 0, %s133
    %s135 = sphi 0, %s133
    %s136 = sphi 0, %s135
    %s150 = sphi 0, %s136
    %s154 = sphi 0, %s154
    %s156 = sphi 0, %s154
    %s157 = sphi 0, %s156
    %s171 = sphi 0, %s157
    %s175 = sphi 0, %s175
    %s177 = sphi 0, %s175
    %s178 = sphi 0, %s177
    %s192 = sphi 0, %s178
    %s196 = sphi 0, %s196
    %s198 = sphi 0, %s196
    %s199 = sphi 0, %s198
    %s213 = sphi 0, %s199
    %s219 = sphi 0, %s221
    %s222 = sphi 0, %s219
    %s223 = sphi 0, %s222
    %s239 = sphi 0, %s223
  $region4: #{actor_forward.1} parent=0 // loop_header_branch
    %18 = sbr.rel (%p16) target = $region8
  $region5: #{actor_forward.1} parent=0 // loop_body
    %s20 = ssub.s32 %s15, 1
    %s21 = ssub.s32 %s15, 2
    %s22 = sadd.s32 %s15, 1
    %s23 = ssub.s32 %s15, %s22
    %p24 = scmp.eq.s32.totalorder %s23, 0
    %s26 = sadd.s32 %s25, 1
    %s27 = scalar_select %p24, %s25, %s26
    %p30 = pneg %p24
    %p31 = scmp.eq.s32.totalorder %s15, 1
    %p32 = por %p30, %p31
    %p33 = scmp.ne.s32.totalorder %s25, %s28
    %p34 = scmp.eq.s32.totalorder %s15, 0
    %p35 = por %p33, %p34
    %p36 = scmp.ne.s32.totalorder %s25, %s28
    %p37 = scmp.eq.s32.totalorder %s20, 1
    %p38 = por %p36, %p37
    %p39 = scmp.ne.s32.totalorder %s28, %s29
    %p40 = scmp.eq.s32.totalorder %s20, 0
    %p41 = por %p39, %p40
    %p42 = scmp.ne.s32.totalorder %s28, %s29
    %p43 = scmp.eq.s32.totalorder %s21, 1
    %p44 = por %p42, %p43
    %p46 = scmp.ne.s32.totalorder %s29, %s45
    %p47 = scmp.eq.s32.totalorder %s21, 0
    %p48 = por %p46, %p47
    %s50 = sadd.s32 %s49, 1
    %p53 = scmp.eq.s32.totalorder %s15, 1
    %p54 = scmp.ne.s32.totalorder %s49, %s51
    %p55 = scmp.eq.s32.totalorder %s15, 0
    %p56 = por %p54, %p55
    %p57 = scmp.ne.s32.totalorder %s49, %s51
    %p58 = scmp.eq.s32.totalorder %s20, 1
    %p59 = por %p57, %p58
    %p60 = scmp.ne.s32.totalorder %s51, %s52
    %p61 = scmp.eq.s32.totalorder %s20, 0
    %p62 = por %p60, %p61
    %p63 = scmp.ne.s32.totalorder %s51, %s52
    %p64 = scmp.eq.s32.totalorder %s21, 1
    %p65 = por %p63, %p64
    %p67 = scmp.ne.s32.totalorder %s52, %s66
    %p68 = scmp.eq.s32.totalorder %s21, 0
    %p69 = por %p67, %p68
    %s71 = sadd.s32 %s70, 1
    %p74 = scmp.eq.s32.totalorder %s15, 1
    %p75 = scmp.ne.s32.totalorder %s70, %s72
    %p76 = scmp.eq.s32.totalorder %s15, 0
    %p77 = por %p75, %p76
    %p78 = scmp.ne.s32.totalorder %s70, %s72
    %p79 = scmp.eq.s32.totalorder %s20, 1
    %p80 = por %p78, %p79
    %p81 = scmp.ne.s32.totalorder %s72, %s73
    %p82 = scmp.eq.s32.totalorder %s20, 0
    %p83 = por %p81, %p82
    %p84 = scmp.ne.s32.totalorder %s72, %s73
    %p85 = scmp.eq.s32.totalorder %s21, 1
    %p86 = por %p84, %p85
    %p88 = scmp.ne.s32.totalorder %s73, %s87
    %p89 = scmp.eq.s32.totalorder %s21, 0
    %p90 = por %p88, %p89
    %s92 = sadd.s32 %s91, 1
    %p95 = scmp.eq.s32.totalorder %s15, 1
    %p96 = scmp.ne.s32.totalorder %s91, %s93
    %p97 = scmp.eq.s32.totalorder %s15, 0
    %p98 = por %p96, %p97
    %p99 = scmp.ne.s32.totalorder %s91, %s93
    %p100 = scmp.eq.s32.totalorder %s20, 1
    %p101 = por %p99, %p100
    %p102 = scmp.ne.s32.totalorder %s93, %s94
    %p103 = scmp.eq.s32.totalorder %s20, 0
    %p104 = por %p102, %p103
    %p105 = scmp.ne.s32.totalorder %s93, %s94
    %p106 = scmp.eq.s32.totalorder %s21, 1
    %p107 = por %p105, %p106
    %p109 = scmp.ne.s32.totalorder %s94, %s108
    %p110 = scmp.eq.s32.totalorder %s21, 0
    %p111 = por %p109, %p110
    %s113 = sadd.s32 %s112, 1
    %p116 = scmp.eq.s32.totalorder %s15, 1
    %p117 = scmp.ne.s32.totalorder %s112, %s114
    %p118 = scmp.eq.s32.totalorder %s15, 0
    %p119 = por %p117, %p118
    %p120 = scmp.ne.s32.totalorder %s112, %s114
    %p121 = scmp.eq.s32.totalorder %s20, 1
    %p122 = por %p120, %p121
    %p123 = scmp.ne.s32.totalorder %s114, %s115
    %p124 = scmp.eq.s32.totalorder %s20, 0
    %p125 = por %p123, %p124
    %p126 = scmp.ne.s32.totalorder %s114, %s115
    %p127 = scmp.eq.s32.totalorder %s21, 1
    %p128 = por %p126, %p127
    %p130 = scmp.ne.s32.totalorder %s115, %s129
    %p131 = scmp.eq.s32.totalorder %s21, 0
    %p132 = por %p130, %p131
    %s134 = sadd.s32 %s133, 1
    %p137 = scmp.eq.s32.totalorder %s15, 1
    %p138 = scmp.ne.s32.totalorder %s133, %s135
    %p139 = scmp.eq.s32.totalorder %s15, 0
    %p140 = por %p138, %p139
    %p141 = scmp.ne.s32.totalorder %s133, %s135
    %p142 = scmp.eq.s32.totalorder %s20, 1
    %p143 = por %p141, %p142
    %p144 = scmp.ne.s32.totalorder %s135, %s136
    %p145 = scmp.eq.s32.totalorder %s20, 0
    %p146 = por %p144, %p145
    %p147 = scmp.ne.s32.totalorder %s135, %s136
    %p148 = scmp.eq.s32.totalorder %s21, 1
    %p149 = por %p147, %p148
    %p151 = scmp.ne.s32.totalorder %s136, %s150
    %p152 = scmp.eq.s32.totalorder %s21, 0
    %p153 = por %p151, %p152
    %s155 = sadd.s32 %s154, 1
    %p158 = scmp.eq.s32.totalorder %s15, 1
    %p159 = scmp.ne.s32.totalorder %s154, %s156
    %p160 = scmp.eq.s32.totalorder %s15, 0
    %p161 = por %p159, %p160
    %p162 = scmp.ne.s32.totalorder %s154, %s156
    %p163 = scmp.eq.s32.totalorder %s20, 1
    %p164 = por %p162, %p163
    %p165 = scmp.ne.s32.totalorder %s156, %s157
    %p166 = scmp.eq.s32.totalorder %s20, 0
    %p167 = por %p165, %p166
    %p168 = scmp.ne.s32.totalorder %s156, %s157
    %p169 = scmp.eq.s32.totalorder %s21, 1
    %p170 = por %p168, %p169
    %p172 = scmp.ne.s32.totalorder %s157, %s171
    %p173 = scmp.eq.s32.totalorder %s21, 0
    %p174 = por %p172, %p173
    %s176 = sadd.s32 %s175, 1
    %p179 = scmp.eq.s32.totalorder %s15, 1
    %p180 = scmp.ne.s32.totalorder %s175, %s177
    %p181 = scmp.eq.s32.totalorder %s15, 0
    %p182 = por %p180, %p181
    %p183 = scmp.ne.s32.totalorder %s175, %s177
    %p184 = scmp.eq.s32.totalorder %s20, 1
    %p185 = por %p183, %p184
    %p186 = scmp.ne.s32.totalorder %s177, %s178
    %p187 = scmp.eq.s32.totalorder %s20, 0
    %p188 = por %p186, %p187
    %p189 = scmp.ne.s32.totalorder %s177, %s178
    %p190 = scmp.eq.s32.totalorder %s21, 1
    %p191 = por %p189, %p190
    %p193 = scmp.ne.s32.totalorder %s178, %s192
    %p194 = scmp.eq.s32.totalorder %s21, 0
    %p195 = por %p193, %p194
    %s197 = sadd.s32 %s196, 1
    %p200 = scmp.eq.s32.totalorder %s15, 1
    %p201 = scmp.ne.s32.totalorder %s196, %s198
    %p202 = scmp.eq.s32.totalorder %s15, 0
    %p203 = por %p201, %p202
    %p204 = scmp.ne.s32.totalorder %s196, %s198
    %p205 = scmp.eq.s32.totalorder %s20, 1
    %p206 = por %p204, %p205
    %p207 = scmp.ne.s32.totalorder %s198, %s199
    %p208 = scmp.eq.s32.totalorder %s20, 0
    %p209 = por %p207, %p208
    %p210 = scmp.ne.s32.totalorder %s198, %s199
    %p211 = scmp.eq.s32.totalorder %s21, 1
    %p212 = por %p210, %p211
    %p214 = scmp.ne.s32.totalorder %s199, %s213
    %p215 = scmp.eq.s32.totalorder %s21, 0
    %p216 = por %p214, %p215
    %s217 = ssub.s32 %s15, %s22
    %p218 = scmp.eq.s32.totalorder %s217, 0
    %s220 = sadd.s32 %s219, 1
    %s221 = scalar_select %p218, %s219, %s220
    %p224 = pneg %p218
    %p225 = scmp.eq.s32.totalorder %s15, 1
    %p226 = por %p224, %p225
    %p227 = scmp.ne.s32.totalorder %s219, %s222
    %p228 = scmp.eq.s32.totalorder %s15, 0
    %p229 = por %p227, %p228
    %p230 = scmp.ne.s32.totalorder %s219, %s222
    %p231 = scmp.eq.s32.totalorder %s20, 1
    %p232 = por %p230, %p231
    %p233 = scmp.ne.s32.totalorder %s222, %s223
    %p234 = scmp.eq.s32.totalorder %s20, 0
    %p235 = por %p233, %p234
    %p236 = scmp.ne.s32.totalorder %s222, %s223
    %p237 = scmp.eq.s32.totalorder %s21, 1
    %p238 = por %p236, %p237
    %p240 = scmp.ne.s32.totalorder %s223, %s239
    %p241 = scmp.eq.s32.totalorder %s21, 0
    %p242 = por %p240, %p241
    %p243 = scmp.le.s32.totalorder 1, %s15
    %p244 = scmp.lt.s32.totalorder %s15, 3
    %p245 = pnand %p243, %p244
    %p246 = pneg %p245
    // Predicated region
    $region9: #{actor_forward.1} parent=5 // pred_check
      _
    $region10: #{actor_forward.1} parent=5 // pred_check_branch
      %248 = sbr.rel (%p245) target = $region12
    $region11: #{actor_forward.1} parent=5 // pred_region
      %s249 = ssub.s32 %s15, 1
      // Predicated region
      $region13: #{actor_forward.1} parent=11 // pred_check
        %p250 = pneg %p62
      $region14: #{actor_forward.1} parent=11 // pred_check_branch
        %252 = sbr.rel (%p250) target = $region16
      $region15: #{actor_forward.1} parent=11 // pred_region
        _
      $region16: #{actor_forward.1} parent=11 // pred_fallthru
        _
      // Predicated region
      $region17: #{actor_forward.1} parent=11 // pred_check
        %p253 = pneg %p83
      $region18: #{actor_forward.1} parent=11 // pred_check_branch
        %255 = sbr.rel (%p253) target = $region20
      $region19: #{actor_forward.1} parent=11 // pred_region
        _
      $region20: #{actor_forward.1} parent=11 // pred_fallthru
        _
      // Predicated region
      $region21: #{actor_forward.1} parent=11 // pred_check
        %p256 = pneg %p104
      $region22: #{actor_forward.1} parent=11 // pred_check_branch
        %258 = sbr.rel (%p256) target = $region24
      $region23: #{actor_forward.1} parent=11 // pred_region
        _
      $region24: #{actor_forward.1} parent=11 // pred_fallthru
        _
      // Predicated region
      $region25: #{actor_forward.1} parent=11 // pred_check
        %p259 = pneg %p125
      $region26: #{actor_forward.1} parent=11 // pred_check_branch
        %261 = sbr.rel (%p259) target = $region28
      $region27: #{actor_forward.1} parent=11 // pred_region
        _
      $region28: #{actor_forward.1} parent=11 // pred_fallthru
        _
      // Predicated region
      $region29: #{actor_forward.1} parent=11 // pred_check
        %p262 = pneg %p146
      $region30: #{actor_forward.1} parent=11 // pred_check_branch
        %264 = sbr.rel (%p262) target = $region32
      $region31: #{actor_forward.1} parent=11 // pred_region
        _
      $region32: #{actor_forward.1} parent=11 // pred_fallthru
        _
      // Predicated region
      $region33: #{actor_forward.1} parent=11 // pred_check
        %p265 = pneg %p167
      $region34: #{actor_forward.1} parent=11 // pred_check_branch
        %267 = sbr.rel (%p265) target = $region36
      $region35: #{actor_forward.1} parent=11 // pred_region
        _
      $region36: #{actor_forward.1} parent=11 // pred_fallthru
        _
      // Predicated region
      $region37: #{actor_forward.1} parent=11 // pred_check
        %p268 = pneg %p188
      $region38: #{actor_forward.1} parent=11 // pred_check_branch
        %270 = sbr.rel (%p268) target = $region40
      $region39: #{actor_forward.1} parent=11 // pred_region
        _
      $region40: #{actor_forward.1} parent=11 // pred_fallthru
        _
      // Predicated region
      $region41: #{actor_forward.1} parent=11 // pred_check
        %p271 = pneg %p209
      $region42: #{actor_forward.1} parent=11 // pred_check_branch
        %273 = sbr.rel (%p271) target = $region44
      $region43: #{actor_forward.1} parent=11 // pred_region
        _
      $region44: #{actor_forward.1} parent=11 // pred_fallthru
        _
    $region12: #{actor_forward.1} parent=5 // pred_fallthru
      _
    %p274 = scmp.lt.s32.totalorder %s15, 2
    // Predicated region
    $region45: #{actor_forward.1} parent=5 // pred_check
      %p275 = pneg %p274
    $region46: #{actor_forward.1} parent=5 // pred_check_branch
      %277 = sbr.rel (%p275) target = $region48
    $region47: #{actor_forward.1} parent=5 // pred_region
      // Predicated region
      $region49: #{actor_forward.1} parent=47 // pred_check
        %p278 = pneg %p35
      $region50: #{actor_forward.1} parent=47 // pred_check_branch
        %280 = sbr.rel (%p278) target = $region52
      $region51: #{actor_forward.1} parent=47 // pred_region
        %s281 = smul.u32 14, %s15
        %p282 = scmp.lt.s32.totalorder %s281, 27
        %s283 = scalar_select %p282, %s281, 27
        %s284 = smul.addr %s283, 8
        %s285 = scalar_lea.vmem %s0, %s284
        %s286 = smul.u32 14, %s15
      $region52: #{actor_forward.1} parent=47 // pred_fallthru
        _
    $region48: #{actor_forward.1} parent=5 // pred_fallthru
      _
    %p287 = scmp.le.s32.totalorder 1, %s15
    %p288 = scmp.lt.s32.totalorder %s15, 3
    %p289 = pnand %p287, %p288
    %p290 = pneg %p289
    // Predicated region
    $region53: #{actor_forward.1} parent=5 // pred_check
      _
    $region54: #{actor_forward.1} parent=5 // pred_check_branch
      %292 = sbr.rel (%p289) target = $region56
    $region55: #{actor_forward.1} parent=5 // pred_region
      %s293 = ssub.s32 %s15, 1
      %s294 = smul.u32 14, %s20
      %p295 = scmp.lt.s32.totalorder %s294, 27
      %s296 = scalar_select %p295, %s294, 27
      %s297 = smul.addr %s296, 8
      %s298 = scalar_lea.vmem %s0, %s297
      %p299 = pneg %p41
      %p300 = pneg %p38
      %p301 = pneg %p62
      %p302 = pneg %p59
      %p303 = pneg %p83
      %p304 = pneg %p80
      %p305 = pneg %p104
      %p306 = pneg %p101
      %p307 = pneg %p125
      %p308 = pneg %p122
      %p309 = pneg %p146
      %p310 = pneg %p143
      %p311 = pneg %p167
      %p312 = pneg %p164
      %p313 = pneg %p188
      %p314 = pneg %p185
      %p315 = pneg %p209
      %p316 = pneg %p206
      %p317 = pneg %p235
      %p318 = pneg %p232
      %s319 = smul.u32 14, %s20
      %p320 = scmp.lt.s32.totalorder %s319, 27
      %s321 = scalar_select %p320, %s319, 27
      %s322 = smul.addr %s321, 8
      %s323 = scalar_lea.vmem %s9, %s322
      %s324 = smul.u32 14, %s20
      %p325 = scmp.lt.s32.totalorder %s324, 27
      %s326 = scalar_select %p325, %s324, 27
      %s327 = smul.addr %s326, 8
      %s328 = scalar_lea.vmem %s0, %s327
      %s329 = smul.u32 14, %s20
      %s330 = smul.u32 14, %s20
      %p331 = scmp.lt.s32.totalorder %s330, 27
      %s332 = scalar_select %p331, %s330, 27
      %s333 = smul.addr %s332, 8
      %s334 = scalar_lea.vmem %s9, %s333
      %s335 = smul.u32 14, %s20
      %v337 = vld [vmem:[%s328] sm:$0xff]
      %v338 = vld [vmem:[%s328 + $0x8] sm:$0xff]
      %v339 = vld [vmem:[%s328 + $0x10] sm:$0xff]
      %v340 = vld [vmem:[%s328 + $0x18] sm:$0xff]
      %v341 = vld [vmem:[%s328 + $0x20] sm:$0xff]
      %v342 = vld [vmem:[%s328 + $0x28] sm:$0xff]
      %v343 = vld [vmem:[%s328 + $0x30] sm:$0xff]
      %v344 = vld [vmem:[%s328 + $0x38] sm:$0xff]
      %v345 = vld [vmem:[%s328 + $0x40] sm:$0xff]
      %v346 = vld [vmem:[%s328 + $0x48] sm:$0xff]
      %v347 = vld [vmem:[%s328 + $0x50] sm:$0xff]
      %v348 = vld [vmem:[%s328 + $0x58] sm:$0xff]
      %v349 = vld [vmem:[%s328 + $0x60] sm:$0xff]
      %v350 = vld [vmem:[%s328 + $0x68] sm:$0xff]
      %v351 = vpack.c.bf16 %v338, %v337
      %v352 = vpack.c.bf16 %v340, %v339
      %v353 = vpack.c.bf16 %v342, %v341
      %v354 = vpack.c.bf16 %v344, %v343
      %v355 = vpack.c.bf16 %v346, %v345
      %v356 = vpack.c.bf16 %v348, %v347
      %v357 = vpack.c.bf16 %v350, %v349
      %v358 = vld [vmem:[%s1] sm:$0xff]
      %v359 = vld [vmem:[%s1 + $0x8] sm:$0xff]
      %v360 = vld [vmem:[%s2] sm:$0x3]
      %v362 = vlaneseq
      %v363 = vshrl.u32 %v362, 7
      %v364 = vsub.s32 0, %v363
      %v365 = vrot.slane %v360, %v364
      %v366 = vlaneseq
      %v367 = vshrl.u32 %v366, 7
      %v368 = vsub.s32 1, %v367
      %v369 = vrot.slane %v360, %v368
      %v374 = vunpack.c.l.b16 %v358
      %v375 = vunpack.c.h.b16 %v358
      %v376 = vunpack.c.l.b16 %v359
      %v377 = vunpack.c.h.b16 %v359
      %v378 = vpack.c.b16 %v376, %v374
      %v379 = vpack.c.b16 %v377, %v375
      %vm382 = vcmask 130048
      %v384 = vsel %vm382, %v351, 0
      %v387 = vsel %vm382, %v352, 0
      %v390 = vsel %vm382, %v353, 0
      %v393 = vsel %vm382, %v354, 0
      %v396 = vsel %vm382, %v355, 0
      %v399 = vsel %vm382, %v356, 0
      %v402 = vsel %vm382, %v357, 0
      %404 = vmatprep.subr.bf16.mxu0 %v379
      %405 = vmatpush1.bf16.msra.mxu0 %v378
      %406 = vmatprep.subr.bf16.mxu0 0
      %407 = vmatpush1.bf16.msra.mxu0 0
      %408 = vmatprep.subr.bf16.mxu0 0
      %409 = vmatpush1.bf16.msra.mxu0 0
      %410 = vmatprep.subr.bf16.mxu0 0
      %411 = vmatpush1.bf16.msra.mxu0 0
      %412 = vmatprep.subr.bf16.mxu0 0
      %413 = vmatpush1.bf16.msra.mxu0 0
      %414 = vmatprep.subr.bf16.mxu0 0
      %415 = vmatpush1.bf16.msra.mxu0 0
      %416 = vmatprep.subr.bf16.mxu0 0
      %417 = vmatpush1.bf16.msra.mxu0 0
      %418 = vmatprep.subr.bf16.mxu0 0
      %419 = vmatpush1.bf16.msra.mxu0 0
      %420 = vmatprep.subr.bf16.mxu0 0
      %421 = vmatpush1.bf16.msra.mxu0 0
      %422 = vmatprep.subr.bf16.mxu0 0
      %423 = vmatpush1.bf16.msra.mxu0 0
      %424 = vmatprep.subr.bf16.mxu0 0
      %425 = vmatpush1.bf16.msra.mxu0 0
      %426 = vmatprep.subr.bf16.mxu0 0
      %427 = vmatpush1.bf16.msra.mxu0 0
      %428 = vmatprep.subr.bf16.mxu0 0
      %429 = vmatpush1.bf16.msra.mxu0 0
      %430 = vmatprep.subr.bf16.mxu0 0
      %431 = vmatpush1.bf16.msra.mxu0 0
      %432 = vmatprep.subr.bf16.mxu0 0
      %433 = vmatpush1.bf16.msra.mxu0 0
      %434 = vmatprep.subr.bf16.mxu0 0
      %435 = vmatpush1.bf16.msra.mxu0 0
      %436 = vmatprep.mubr.bf16.mxu0 0
      %437 = vmatmul.mubr.bf16.gmra.mrb[0].mxu0 %v384
      %v438 = vpop.f32.mrb[0].mxu0
      %v439 = vadd.f32 %v365, %v438
      %v440 = vpop.f32.mrb[0].mxu0
      %v441 = vadd.f32 %v369, %v440
      %v442 = vpop.f32.mrb[0].mxu0
      %v443 = vadd.f32 %v365, %v442
      %v444 = vpop.f32.mrb[0].mxu0
      %v445 = vadd.f32 %v369, %v444
      %446 = vmatprep.mubr.bf16.mxu0 0
      %447 = vmatmul.mubr.bf16.gmra.mrb[0].mxu0 %v387
      %v448 = vpop.f32.mrb[0].mxu0
      %v449 = vadd.f32 %v365, %v448
      %v450 = vpop.f32.mrb[0].mxu0
      %v451 = vadd.f32 %v369, %v450
      %v452 = vpop.f32.mrb[0].mxu0
      %v453 = vadd.f32 %v365, %v452
      %v454 = vpop.f32.mrb[0].mxu0
      %v455 = vadd.f32 %v369, %v454
      %456 = vmatprep.mubr.bf16.mxu0 0
      %457 = vmatmul.mubr.bf16.gmra.mrb[0].mxu0 %v390
      %v458 = vpop.f32.mrb[0].mxu0
      %v459 = vadd.f32 %v365, %v458
      %v460 = vpop.f32.mrb[0].mxu0
      %v461 = vadd.f32 %v369, %v460
      %v462 = vpop.f32.mrb[0].mxu0
      %v463 = vadd.f32 %v365, %v462
      %v464 = vpop.f32.mrb[0].mxu0
      %v465 = vadd.f32 %v369, %v464
      %466 = vmatprep.mubr.bf16.mxu0 0
      %467 = vmatmul.mubr.bf16.gmra.mrb[0].mxu0 %v393
      %v468 = vpop.f32.mrb[0].mxu0
      %v469 = vadd.f32 %v365, %v468
      %v470 = vpop.f32.mrb[0].mxu0
      %v471 = vadd.f32 %v369, %v470
      %v472 = vpop.f32.mrb[0].mxu0
      %v473 = vadd.f32 %v365, %v472
      %v474 = vpop.f32.mrb[0].mxu0
      %v475 = vadd.f32 %v369, %v474
      %476 = vmatprep.mubr.bf16.mxu0 0
      %477 = vmatmul.mubr.bf16.gmra.mrb[0].mxu0 %v396
      %v478 = vpop.f32.mrb[0].mxu0
      %v479 = vadd.f32 %v365, %v478
      %v480 = vpop.f32.mrb[0].mxu0
      %v481 = vadd.f32 %v369, %v480
      %v482 = vpop.f32.mrb[0].mxu0
      %v483 = vadd.f32 %v365, %v482
      %v484 = vpop.f32.mrb[0].mxu0
      %v485 = vadd.f32 %v369, %v484
      %486 = vmatprep.mubr.bf16.mxu0 0
      %487 = vmatmul.mubr.bf16.gmra.mrb[0].mxu0 %v399
      %v488 = vpop.f32.mrb[0].mxu0
      %v489 = vadd.f32 %v365, %v488
      %v490 = vpop.f32.mrb[0].mxu0
      %v491 = vadd.f32 %v369, %v490
      %v492 = vpop.f32.mrb[0].mxu0
      %v493 = vadd.f32 %v365, %v492
      %v494 = vpop.f32.mrb[0].mxu0
      %v495 = vadd.f32 %v369, %v494
      %496 = vmatprep.mubr.bf16.mxu0 0
      %497 = vmatmul.mubr.bf16.gmra.mrb[0].mxu0 %v402
      %v498 = vpop.f32.mrb[0].mxu0
      %v499 = vadd.f32 %v365, %v498
      %v500 = vpop.f32.mrb[0].mxu0
      %v501 = vadd.f32 %v369, %v500
      %v502 = vpop.f32.mrb[0].mxu0
      %v503 = vadd.f32 %v365, %v502
      %v504 = vpop.f32.mrb[0].mxu0
      %v505 = vadd.f32 %v369, %v504
      %506 = vdwg.mxu0
      %v507 = vmax.f32 %v439, 0.0
      %v508 = vmax.f32 %v441, 0.0
      %v509 = vmax.f32 %v443, 0.0
      %v510 = vmax.f32 %v445, 0.0
      %v511 = vmax.f32 %v449, 0.0
      %v512 = vmax.f32 %v451, 0.0
      %v513 = vmax.f32 %v453, 0.0
      %v514 = vmax.f32 %v455, 0.0
      %v515 = vmax.f32 %v459, 0.0
      %v516 = vmax.f32 %v461, 0.0
      %v517 = vmax.f32 %v463, 0.0
      %v518 = vmax.f32 %v465, 0.0
      %v519 = vmax.f32 %v469, 0.0
      %v520 = vmax.f32 %v471, 0.0
      %v521 = vmax.f32 %v473, 0.0
      %v522 = vmax.f32 %v475, 0.0
      %v523 = vmax.f32 %v479, 0.0
      %v524 = vmax.f32 %v481, 0.0
      %v525 = vmax.f32 %v483, 0.0
      %v526 = vmax.f32 %v485, 0.0
      %v527 = vmax.f32 %v489, 0.0
      %v528 = vmax.f32 %v491, 0.0
      %v529 = vmax.f32 %v493, 0.0
      %v530 = vmax.f32 %v495, 0.0
      %v531 = vmax.f32 %v499, 0.0
      %v532 = vmax.f32 %v501, 0.0
      %v533 = vmax.f32 %v503, 0.0
      %v534 = vmax.f32 %v505, 0.0
      %v535 = vpack.c.bf16 %v509, %v507
      %v536 = vpack.c.bf16 %v510, %v508
      %v537 = vpack.c.bf16 %v513, %v511
      %v538 = vpack.c.bf16 %v514, %v512
      %v539 = vpack.c.bf16 %v517, %v515
      %v540 = vpack.c.bf16 %v518, %v516
      %v541 = vpack.c.bf16 %v521, %v519
      %v542 = vpack.c.bf16 %v522, %v520
      %v543 = vpack.c.bf16 %v525, %v523
      %v544 = vpack.c.bf16 %v526, %v524
      %v545 = vpack.c.bf16 %v529, %v527
      %v546 = vpack.c.bf16 %v530, %v528
      %v547 = vpack.c.bf16 %v533, %v531
      %v548 = vpack.c.bf16 %v534, %v532
      %v549 = vld [vmem:[%s3] sm:$0xff]
      %v550 = vld [vmem:[%s3 + $0x8] sm:$0xff]
      %v551 = vld [vmem:[%s3 + $0x10] sm:$0xff]
      %v552 = vld [vmem:[%s3 + $0x18] sm:$0xff]
      %v553 = vld [vmem:[%s3 + $0x20] sm:$0xff]
      %v554 = vld [vmem:[%s3 + $0x28] sm:$0xff]
      %v555 = vld [vmem:[%s3 + $0x30] sm:$0xff]
      %v556 = vld [vmem:[%s3 + $0x38] sm:$0xff]
      %v557 = vld [vmem:[%s3 + $0x40] sm:$0xff]
      %v558 = vld [vmem:[%s3 + $0x48] sm:$0xff]
      %v559 = vld [vmem:[%s3 + $0x50] sm:$0xff]
      %v560 = vld [vmem:[%s3 + $0x58] sm:$0xff]
      %v561 = vld [vmem:[%s3 + $0x60] sm:$0xff]
      %v562 = vld [vmem:[%s3 + $0x68] sm:$0xff]
      %v563 = vld [vmem:[%s3 + $0x70] sm:$0xff]
      %v564 = vld [vmem:[%s3 + $0x78] sm:$0xff]
      %v565 = vld [vmem:[%s3 + $0x80] sm:$0xff]
      %v566 = vld [vmem:[%s3 + $0x88] sm:$0xff]
      %v567 = vld [vmem:[%s3 + $0x90] sm:$0xff]
      %v568 = vld [vmem:[%s3 + $0x98] sm:$0xff]
      %v569 = vld [vmem:[%s3 + $0xa0] sm:$0xff]
      %v570 = vld [vmem:[%s3 + $0xa8] sm:$0xff]
      %v571 = vld [vmem:[%s3 + $0xb0] sm:$0xff]
      %v572 = vld [vmem:[%s3 + $0xb8] sm:$0xff]
      %v573 = vld [vmem:[%s3 + $0xc0] sm:$0xff]
      %v574 = vld [vmem:[%s3 + $0xc8] sm:$0xff]
      %v575 = vld [vmem:[%s3 + $0xd0] sm:$0xff]
      %v576 = vld [vmem:[%s3 + $0xd8] sm:$0xff]
      %v577 = vld [vmem:[%s3 + $0xe0] sm:$0xff]
      %v578 = vld [vmem:[%s3 + $0xe8] sm:$0xff]
      %v579 = vld [vmem:[%s3 + $0xf0] sm:$0xff]
      %v580 = vld [vmem:[%s3 + $0xf8] sm:$0xff]
      %v581 = vld [vmem:[%s4] sm:$0x3]
      %v583 = vlaneseq
      %v584 = vshrl.u32 %v583, 7
      %v585 = vsub.s32 0, %v584
      %v586 = vrot.slane %v581, %v585
      %v587 = vlaneseq
      %v588 = vshrl.u32 %v587, 7
      %v589 = vsub.s32 1, %v588
      %v590 = vrot.slane %v581, %v589
      %v625 = vunpack.c.l.b16 %v549
      %v626 = vunpack.c.h.b16 %v549
      %v627 = vunpack.c.l.b16 %v550
      %v628 = vunpack.c.h.b16 %v550
      %v629 = vunpack.c.l.b16 %v551
      %v630 = vunpack.c.h.b16 %v551
      %v631 = vunpack.c.l.b16 %v552
      %v632 = vunpack.c.h.b16 %v552
      %v633 = vunpack.c.l.b16 %v553
      %v634 = vunpack.c.h.b16 %v553
      %v635 = vunpack.c.l.b16 %v554
      %v636 = vunpack.c.h.b16 %v554
      %v637 = vunpack.c.l.b16 %v555
      %v638 = vunpack.c.h.b16 %v555
      %v639 = vunpack.c.l.b16 %v556
      %v640 = vunpack.c.h.b16 %v556
      %v641 = vunpack.c.l.b16 %v557
      %v642 = vunpack.c.h.b16 %v557
      %v643 = vunpack.c.l.b16 %v558
      %v644 = vunpack.c.h.b16 %v558
      %v645 = vunpack.c.l.b16 %v559
      %v646 = vunpack.c.h.b16 %v559
      %v647 = vunpack.c.l.b16 %v560
      %v648 = vunpack.c.h.b16 %v560
      %v649 = vunpack.c.l.b16 %v561
      %v650 = vunpack.c.h.b16 %v561
      %v651 = vunpack.c.l.b16 %v562
      %v652 = vunpack.c.h.b16 %v562
      %v653 = vunpack.c.l.b16 %v563
      %v654 = vunpack.c.h.b16 %v563
      %v655 = vunpack.c.l.b16 %v564
      %v656 = vunpack.c.h.b16 %v564
      %v657 = vunpack.c.l.b16 %v565
      %v658 = vunpack.c.h.b16 %v565
      %v659 = vunpack.c.l.b16 %v566
      %v660 = vunpack.c.h.b16 %v566
      %v661 = vunpack.c.l.b16 %v567
      %v662 = vunpack.c.h.b16 %v567
      %v663 = vunpack.c.l.b16 %v568
      %v664 = vunpack.c.h.b16 %v568
      %v665 = vunpack.c.l.b16 %v569
      %v666 = vunpack.c.h.b16 %v569
      %v667 = vunpack.c.l.b16 %v570
      %v668 = vunpack.c.h.b16 %v570
      %v669 = vunpack.c.l.b16 %v571
      %v670 = vunpack.c.h.b16 %v571
      %v671 = vunpack.c.l.b16 %v572
      %v672 = vunpack.c.h.b16 %v572
      %v673 = vunpack.c.l.b16 %v573
      %v674 = vunpack.c.h.b16 %v573
      %v675 = vunpack.c.l.b16 %v574
      %v676 = vunpack.c.h.b16 %v574
      %v677 = vunpack.c.l.b16 %v575
      %v678 = vunpack.c.h.b16 %v575
      %v679 = vunpack.c.l.b16 %v576
      %v680 = vunpack.c.h.b16 %v576
      %v681 = vunpack.c.l.b16 %v577
      %v682 = vunpack.c.h.b16 %v577
      %v683 = vunpack.c.l.b16 %v578
      %v684 = vunpack.c.h.b16 %v578
      %v685 = vunpack.c.l.b16 %v579
      %v686 = vunpack.c.h.b16 %v579
      %v687 = vunpack.c.l.b16 %v580
      %v688 = vunpack.c.h.b16 %v580
      %v689 = vpack.c.b16 %v627, %v625
      %v690 = vpack.c.b16 %v628, %v626
      %v691 = vpack.c.b16 %v631, %v629
      %v692 = vpack.c.b16 %v632, %v630
      %v693 = vpack.c.b16 %v635, %v633
      %v694 = vpack.c.b16 %v636, %v634
      %v695 = vpack.c.b16 %v639, %v637
      %v696 = vpack.c.b16 %v640, %v638
      %v697 = vpack.c.b16 %v643, %v641
      %v698 = vpack.c.b16 %v644, %v642
      %v699 = vpack.c.b16 %v647, %v645
      %v700 = vpack.c.b16 %v648, %v646
      %v701 = vpack.c.b16 %v651, %v649
      %v702 = vpack.c.b16 %v652, %v650
      %v703 = vpack.c.b16 %v655, %v653
      %v704 = vpack.c.b16 %v656, %v654
      %v705 = vpack.c.b16 %v659, %v657
      %v706 = vpack.c.b16 %v660, %v658
      %v707 = vpack.c.b16 %v663, %v661
      %v708 = vpack.c.b16 %v664, %v662
      %v709 = vpack.c.b16 %v667, %v665
      %v710 = vpack.c.b16 %v668, %v666
      %v711 = vpack.c.b16 %v671, %v669
      %v712 = vpack.c.b16 %v672, %v670
      %v713 = vpack.c.b16 %v675, %v673
      %v714 = vpack.c.b16 %v676, %v674
      %v715 = vpack.c.b16 %v679, %v677
      %v716 = vpack.c.b16 %v680, %v678
      %v717 = vpack.c.b16 %v683, %v681
      %v718 = vpack.c.b16 %v684, %v682
      %v719 = vpack.c.b16 %v687, %v685
      %v720 = vpack.c.b16 %v688, %v686
      %753 = vmatprep.subr.bf16.mxu0 %v690
      %754 = vmatpush1.bf16.msra.mxu0 %v689
      %755 = vmatprep.subr.bf16.mxu0 %v692
      %756 = vmatpush1.bf16.msra.mxu0 %v691
      %757 = vmatprep.subr.bf16.mxu0 %v694
      %758 = vmatpush1.bf16.msra.mxu0 %v693
      %759 = vmatprep.subr.bf16.mxu0 %v696
      %760 = vmatpush1.bf16.msra.mxu0 %v695
      %761 = vmatprep.subr.bf16.mxu0 %v698
      %762 = vmatpush1.bf16.msra.mxu0 %v697
      %763 = vmatprep.subr.bf16.mxu0 %v700
      %764 = vmatpush1.bf16.msra.mxu0 %v699
      %765 = vmatprep.subr.bf16.mxu0 %v702
      %766 = vmatpush1.bf16.msra.mxu0 %v701
      %767 = vmatprep.subr.bf16.mxu0 %v704
      %768 = vmatpush1.bf16.msra.mxu0 %v703
      %769 = vmatprep.subr.bf16.mxu0 %v706
      %770 = vmatpush1.bf16.msra.mxu0 %v705
      %771 = vmatprep.subr.bf16.mxu0 %v708
      %772 = vmatpush1.bf16.msra.mxu0 %v707
      %773 = vmatprep.subr.bf16.mxu0 %v710
      %774 = vmatpush1.bf16.msra.mxu0 %v709
      %775 = vmatprep.subr.bf16.mxu0 %v712
      %776 = vmatpush1.bf16.msra.mxu0 %v711
      %777 = vmatprep.subr.bf16.mxu0 %v714
      %778 = vmatpush1.bf16.msra.mxu0 %v713
      %779 = vmatprep.subr.bf16.mxu0 %v716
      %780 = vmatpush1.bf16.msra.mxu0 %v715
      %781 = vmatprep.subr.bf16.mxu0 %v718
      %782 = vmatpush1.bf16.msra.mxu0 %v717
      %783 = vmatprep.subr.bf16.mxu0 %v720
      %784 = vmatpush1.bf16.msra.mxu0 %v719
      %785 = vmatprep.mubr.bf16.mxu0 %v536
      %786 = vmatmul.mubr.bf16.gmra.mrb[0].mxu0 %v535
      %v787 = vpop.f32.mrb[0].mxu0
      %v788 = vadd.f32 %v586, %v787
      %v789 = vpop.f32.mrb[0].mxu0
      %v790 = vadd.f32 %v590, %v789
      %v791 = vpop.f32.mrb[0].mxu0
      %v792 = vadd.f32 %v586, %v791
      %v793 = vpop.f32.mrb[0].mxu0
      %v794 = vadd.f32 %v590, %v793
      %795 = vmatprep.mubr.bf16.mxu0 %v538
      %796 = vmatmul.mubr.bf16.gmra.mrb[0].mxu0 %v537
      %v797 = vpop.f32.mrb[0].mxu0
      %v798 = vadd.f32 %v586, %v797
      %v799 = vpop.f32.mrb[0].mxu0
      %v800 = vadd.f32 %v590, %v799
      %v801 = vpop.f32.mrb[0].mxu0
      %v802 = vadd.f32 %v586, %v801
      %v803 = vpop.f32.mrb[0].mxu0
      %v804 = vadd.f32 %v590, %v803
      %805 = vmatprep.mubr.bf16.mxu0 %v540
      %806 = vmatmul.mubr.bf16.gmra.mrb[0].mxu0 %v539
      %v807 = vpop.f32.mrb[0].mxu0
      %v808 = vadd.f32 %v586, %v807
      %v809 = vpop.f32.mrb[0].mxu0
      %v810 = vadd.f32 %v590, %v809
      %v811 = vpop.f32.mrb[0].mxu0
      %v812 = vadd.f32 %v586, %v811
      %v813 = vpop.f32.mrb[0].mxu0
      %v814 = vadd.f32 %v590, %v813
      %815 = vmatprep.mubr.bf16.mxu0 %v542
      %816 = vmatmul.mubr.bf16.gmra.mrb[0].mxu0 %v541
      %v817 = vpop.f32.mrb[0].mxu0
      %v818 = vadd.f32 %v586, %v817
      %v819 = vpop.f32.mrb[0].mxu0
      %v820 = vadd.f32 %v590, %v819
      %v821 = vpop.f32.mrb[0].mxu0
      %v822 = vadd.f32 %v586, %v821
      %v823 = vpop.f32.mrb[0].mxu0
      %v824 = vadd.f32 %v590, %v823
      %825 = vmatprep.mubr.bf16.mxu0 %v544
      %826 = vmatmul.mubr.bf16.gmra.mrb[0].mxu0 %v543
      %v827 = vpop.f32.mrb[0].mxu0
      %v828 = vadd.f32 %v586, %v827
      %v829 = vpop.f32.mrb[0].mxu0
      %v830 = vadd.f32 %v590, %v829
      %v831 = vpop.f32.mrb[0].mxu0
      %v832 = vadd.f32 %v586, %v831
      %v833 = vpop.f32.mrb[0].mxu0
      %v834 = vadd.f32 %v590, %v833
      %835 = vmatprep.mubr.bf16.mxu0 %v546
      %836 = vmatmul.mubr.bf16.gmra.mrb[0].mxu0 %v545
      %v837 = vpop.f32.mrb[0].mxu0
      %v838 = vadd.f32 %v586, %v837
      %v839 = vpop.f32.mrb[0].mxu0
      %v840 = vadd.f32 %v590, %v839
      %v841 = vpop.f32.mrb[0].mxu0
      %v842 = vadd.f32 %v586, %v841
      %v843 = vpop.f32.mrb[0].mxu0
      %v844 = vadd.f32 %v590, %v843
      %845 = vmatprep.mubr.bf16.mxu0 %v548
      %846 = vmatmul.mubr.bf16.gmra.mrb[0].mxu0 %v547
      %v847 = vpop.f32.mrb[0].mxu0
      %v848 = vadd.f32 %v586, %v847
      %v849 = vpop.f32.mrb[0].mxu0
      %v850 = vadd.f32 %v590, %v849
      %v851 = vpop.f32.mrb[0].mxu0
      %v852 = vadd.f32 %v586, %v851
      %v853 = vpop.f32.mrb[0].mxu0
      %v854 = vadd.f32 %v590, %v853
      %855 = vdwg.mxu0
      %v856 = vmax.f32 %v788, 0.0
      %v857 = vmax.f32 %v790, 0.0
      %v858 = vmax.f32 %v792, 0.0
      %v859 = vmax.f32 %v794, 0.0
      %v860 = vmax.f32 %v798, 0.0
      %v861 = vmax.f32 %v800, 0.0
      %v862 = vmax.f32 %v802, 0.0
      %v863 = vmax.f32 %v804, 0.0
      %v864 = vmax.f32 %v808, 0.0
      %v865 = vmax.f32 %v810, 0.0
      %v866 = vmax.f32 %v812, 0.0
      %v867 = vmax.f32 %v814, 0.0
      %v868 = vmax.f32 %v818, 0.0
      %v869 = vmax.f32 %v820, 0.0
      %v870 = vmax.f32 %v822, 0.0
      %v871 = vmax.f32 %v824, 0.0
      %v872 = vmax.f32 %v828, 0.0
      %v873 = vmax.f32 %v830, 0.0
      %v874 = vmax.f32 %v832, 0.0
      %v875 = vmax.f32 %v834, 0.0
      %v876 = vmax.f32 %v838, 0.0
      %v877 = vmax.f32 %v840, 0.0
      %v878 = vmax.f32 %v842, 0.0
      %v879 = vmax.f32 %v844, 0.0
      %v880 = vmax.f32 %v848, 0.0
      %v881 = vmax.f32 %v850, 0.0
      %v882 = vmax.f32 %v852, 0.0
      %v883 = vmax.f32 %v854, 0.0
      %v884 = vpack.c.bf16 %v858, %v856
      %v885 = vpack.c.bf16 %v859, %v857
      %v886 = vpack.c.bf16 %v862, %v860
      %v887 = vpack.c.bf16 %v863, %v861
      %v888 = vpack.c.bf16 %v866, %v864
      %v889 = vpack.c.bf16 %v867, %v865
      %v890 = vpack.c.bf16 %v870, %v868
      %v891 = vpack.c.bf16 %v871, %v869
      %v892 = vpack.c.bf16 %v874, %v872
      %v893 = vpack.c.bf16 %v875, %v873
      %v894 = vpack.c.bf16 %v878, %v876
      %v895 = vpack.c.bf16 %v879, %v877
      %v896 = vpack.c.bf16 %v882, %v880
      %v897 = vpack.c.bf16 %v883, %v881
      %v898 = vld [vmem:[%s5] sm:$0xf]
      %v899 = vld [vmem:[%s5 + $0x4] sm:$0xf]
      %v900 = vld [vmem:[%s5 + $0x8] sm:$0xf]
      %v901 = vld [vmem:[%s5 + $0xc] sm:$0xf]
      %v902 = vld [vmem:[%s5 + $0x10] sm:$0xf]
      %v903 = vld [vmem:[%s5 + $0x14] sm:$0xf]
      %v904 = vld [vmem:[%s5 + $0x18] sm:$0xf]
      %v905 = vld [vmem:[%s5 + $0x1c] sm:$0xf]
      %v906 = vld [vmem:[%s5 + $0x20] sm:$0xf]
      %v907 = vld [vmem:[%s5 + $0x24] sm:$0xf]
      %v908 = vld [vmem:[%s5 + $0x28] sm:$0xf]
      %v909 = vld [vmem:[%s5 + $0x2c] sm:$0xf]
      %v910 = vld [vmem:[%s5 + $0x30] sm:$0xf]
      %v911 = vld [vmem:[%s5 + $0x34] sm:$0xf]
      %v912 = vld [vmem:[%s5 + $0x38] sm:$0xf]
      %v913 = vld [vmem:[%s5 + $0x3c] sm:$0xf]
      %v914 = vld [vmem:[%s5 + $0x40] sm:$0xf]
      %v915 = vld [vmem:[%s5 + $0x44] sm:$0xf]
      %v916 = vld [vmem:[%s5 + $0x48] sm:$0xf]
      %v917 = vld [vmem:[%s5 + $0x4c] sm:$0xf]
      %v918 = vld [vmem:[%s5 + $0x50] sm:$0xf]
      %v919 = vld [vmem:[%s5 + $0x54] sm:$0xf]
      %v920 = vld [vmem:[%s5 + $0x58] sm:$0xf]
      %v921 = vld [vmem:[%s5 + $0x5c] sm:$0xf]
      %v922 = vld [vmem:[%s5 + $0x60] sm:$0xf]
      %v923 = vld [vmem:[%s5 + $0x64] sm:$0xf]
      %v924 = vld [vmem:[%s5 + $0x68] sm:$0xf]
      %v925 = vld [vmem:[%s5 + $0x6c] sm:$0xf]
      %v926 = vld [vmem:[%s5 + $0x70] sm:$0xf]
      %v927 = vld [vmem:[%s5 + $0x74] sm:$0xf]
      %v928 = vld [vmem:[%s5 + $0x78] sm:$0xf]
      %v929 = vld [vmem:[%s5 + $0x7c] sm:$0xf]
      %v930 = vld [vmem:[%s6] sm:$0x1]
      %v932 = vlaneseq
      %v933 = vshrl.u32 %v932, 7
      %v934 = vsub.s32 0, %v933
      %v935 = vrot.slane %v930, %v934
      %v969 = vunpack.c.l.b16 %v898
      %v970 = vunpack.c.l.b16 %v899
      %v971 = vunpack.c.l.b16 %v900
      %v972 = vunpack.c.l.b16 %v901
      %v973 = vunpack.c.l.b16 %v902
      %v974 = vunpack.c.l.b16 %v903
      %v975 = vunpack.c.l.b16 %v904
      %v976 = vunpack.c.l.b16 %v905
      %v977 = vunpack.c.l.b16 %v906
      %v978 = vunpack.c.l.b16 %v907
      %v979 = vunpack.c.l.b16 %v908
      %v980 = vunpack.c.l.b16 %v909
      %v981 = vunpack.c.l.b16 %v910
      %v982 = vunpack.c.l.b16 %v911
      %v983 = vunpack.c.l.b16 %v912
      %v984 = vunpack.c.l.b16 %v913
      %v985 = vunpack.c.l.b16 %v914
      %v986 = vunpack.c.l.b16 %v915
      %v987 = vunpack.c.l.b16 %v916
      %v988 = vunpack.c.l.b16 %v917
      %v989 = vunpack.c.l.b16 %v918
      %v990 = vunpack.c.l.b16 %v919
      %v991 = vunpack.c.l.b16 %v920
      %v992 = vunpack.c.l.b16 %v921
      %v993 = vunpack.c.l.b16 %v922
      %v994 = vunpack.c.l.b16 %v923
      %v995 = vunpack.c.l.b16 %v924
      %v996 = vunpack.c.l.b16 %v925
      %v997 = vunpack.c.l.b16 %v926
      %v998 = vunpack.c.l.b16 %v927
      %v999 = vunpack.c.l.b16 %v928
      %v1000 = vunpack.c.l.b16 %v929
      %v1001 = vpack.c.b16 %v970, %v969
      %v1002 = vpack.c.b16 %v972, %v971
      %v1003 = vpack.c.b16 %v974, %v973
      %v1004 = vpack.c.b16 %v976, %v975
      %v1005 = vpack.c.b16 %v978, %v977
      %v1006 = vpack.c.b16 %v980, %v979
      %v1007 = vpack.c.b16 %v982, %v981
      %v1008 = vpack.c.b16 %v984, %v983
      %v1009 = vpack.c.b16 %v986, %v985
      %v1010 = vpack.c.b16 %v988, %v987
      %v1011 = vpack.c.b16 %v990, %v989
      %v1012 = vpack.c.b16 %v992, %v991
      %v1013 = vpack.c.b16 %v994, %v993
      %v1014 = vpack.c.b16 %v996, %v995
      %v1015 = vpack.c.b16 %v998, %v997
      %v1016 = vpack.c.b16 %v1000, %v999
      %1033 = vmatprep.subr.bf16.mxu0 0
      %1034 = vmatpush1.bf16.msra.mxu0 %v1001
      %1035 = vmatprep.subr.bf16.mxu0 0
      %1036 = vmatpush1.bf16.msra.mxu0 %v1002
      %1037 = vmatprep.subr.bf16.mxu0 0
      %1038 = vmatpush1.bf16.msra.mxu0 %v1003
      %1039 = vmatprep.subr.bf16.mxu0 0
      %1040 = vmatpush1.bf16.msra.mxu0 %v1004
      %1041 = vmatprep.subr.bf16.mxu0 0
      %1042 = vmatpush1.bf16.msra.mxu0 %v1005
      %1043 = vmatprep.subr.bf16.mxu0 0
      %1044 = vmatpush1.bf16.msra.mxu0 %v1006
      %1045 = vmatprep.subr.bf16.mxu0 0
      %1046 = vmatpush1.bf16.msra.mxu0 %v1007
      %1047 = vmatprep.subr.bf16.mxu0 0
      %1048 = vmatpush1.bf16.msra.mxu0 %v1008
      %1049 = vmatprep.subr.bf16.mxu0 0
      %1050 = vmatpush1.bf16.msra.mxu0 %v1009
      %1051 = vmatprep.subr.bf16.mxu0 0
      %1052 = vmatpush1.bf16.msra.mxu0 %v1010
      %1053 = vmatprep.subr.bf16.mxu0 0
      %1054 = vmatpush1.bf16.msra.mxu0 %v1011
      %1055 = vmatprep.subr.bf16.mxu0 0
      %1056 = vmatpush1.bf16.msra.mxu0 %v1012
      %1057 = vmatprep.subr.bf16.mxu0 0
      %1058 = vmatpush1.bf16.msra.mxu0 %v1013
      %1059 = vmatprep.subr.bf16.mxu0 0
      %1060 = vmatpush1.bf16.msra.mxu0 %v1014
      %1061 = vmatprep.subr.bf16.mxu0 0
      %1062 = vmatpush1.bf16.msra.mxu0 %v1015
      %1063 = vmatprep.subr.bf16.mxu0 0
      %1064 = vmatpush1.bf16.msra.mxu0 %v1016
      %1065 = vmatprep.mubr.bf16.mxu0 %v885
      %1066 = vmatmul.mubr.bf16.gmra.mrb[0].mxu0 %v884
      %v1067 = vpop.f32.mrb[0].mxu0
      %v1068 = vadd.f32 %v935, %v1067
      %v1069 = vpop.f32.mrb[0].mxu0
      %v1070 = vpop.f32.mrb[0].mxu0
      %v1071 = vadd.f32 %v935, %v1070
      %v1072 = vpop.f32.mrb[0].mxu0
      %1073 = vmatprep.mubr.bf16.mxu0 %v887
      %1074 = vmatmul.mubr.bf16.gmra.mrb[0].mxu0 %v886
      %v1075 = vpop.f32.mrb[0].mxu0
      %v1076 = vadd.f32 %v935, %v1075
      %v1077 = vpop.f32.mrb[0].mxu0
      %v1078 = vpop.f32.mrb[0].mxu0
      %v1079 = vadd.f32 %v935, %v1078
      %v1080 = vpop.f32.mrb[0].mxu0
      %1081 = vmatprep.mubr.bf16.mxu0 %v889
      %1082 = vmatmul.mubr.bf16.gmra.mrb[0].mxu0 %v888
      %v1083 = vpop.f32.mrb[0].mxu0
      %v1084 = vadd.f32 %v935, %v1083
      %v1085 = vpop.f32.mrb[0].mxu0
      %v1086 = vpop.f32.mrb[0].mxu0
      %v1087 = vadd.f32 %v935, %v1086
      %v1088 = vpop.f32.mrb[0].mxu0
      %1089 = vmatprep.mubr.bf16.mxu0 %v891
      %1090 = vmatmul.mubr.bf16.gmra.mrb[0].mxu0 %v890
      %v1091 = vpop.f32.mrb[0].mxu0
      %v1092 = vadd.f32 %v935, %v1091
      %v1093 = vpop.f32.mrb[0].mxu0
      %v1094 = vpop.f32.mrb[0].mxu0
      %v1095 = vadd.f32 %v935, %v1094
      %v1096 = vpop.f32.mrb[0].mxu0
      %1097 = vmatprep.mubr.bf16.mxu0 %v893
      %1098 = vmatmul.mubr.bf16.gmra.mrb[0].mxu0 %v892
      %v1099 = vpop.f32.mrb[0].mxu0
      %v1100 = vadd.f32 %v935, %v1099
      %v1101 = vpop.f32.mrb[0].mxu0
      %v1102 = vpop.f32.mrb[0].mxu0
      %v1103 = vadd.f32 %v935, %v1102
      %v1104 = vpop.f32.mrb[0].mxu0
      %1105 = vmatprep.mubr.bf16.mxu0 %v895
      %1106 = vmatmul.mubr.bf16.gmra.mrb[0].mxu0 %v894
      %v1107 = vpop.f32.mrb[0].mxu0
      %v1108 = vadd.f32 %v935, %v1107
      %v1109 = vpop.f32.mrb[0].mxu0
      %v1110 = vpop.f32.mrb[0].mxu0
      %v1111 = vadd.f32 %v935, %v1110
      %v1112 = vpop.f32.mrb[0].mxu0
      %1113 = vmatprep.mubr.bf16.mxu0 %v897
      %1114 = vmatmul.mubr.bf16.gmra.mrb[0].mxu0 %v896
      %v1115 = vpop.f32.mrb[0].mxu0
      %v1116 = vadd.f32 %v935, %v1115
      %v1117 = vpop.f32.mrb[0].mxu0
      %v1118 = vpop.f32.mrb[0].mxu0
      %v1119 = vadd.f32 %v935, %v1118
      %v1120 = vpop.f32.mrb[0].mxu0
      %1121 = vdwg.mxu0
      %v1122 = vtanh.pop %v1068
      %v1123 = vtanh.pop %v1071
      %v1124 = vtanh.pop %v1076
      %v1125 = vtanh.pop %v1079
      %v1126 = vtanh.pop %v1084
      %v1127 = vtanh.pop %v1087
      %v1128 = vtanh.pop %v1092
      %v1129 = vtanh.pop %v1095
      %v1130 = vtanh.pop %v1100
      %v1131 = vtanh.pop %v1103
      %v1132 = vtanh.pop %v1108
      %v1133 = vtanh.pop %v1111
      %v1134 = vtanh.pop %v1116
      %v1135 = vtanh.pop %v1119
      %v1136 = vld [vmem:[%s7] sm:$0x1]
      %v1138 = vlaneseq
      %v1139 = vshrl.u32 %v1138, 7
      %v1140 = vsub.s32 0, %v1139
      %v1141 = vrot.slane %v1136, %v1140
      %v1143 = vmul.f32 %v1122, %v1141
      %v1144 = vmul.f32 %v1123, %v1141
      %v1145 = vmul.f32 %v1124, %v1141
      %v1146 = vmul.f32 %v1125, %v1141
      %v1147 = vmul.f32 %v1126, %v1141
      %v1148 = vmul.f32 %v1127, %v1141
      %v1149 = vmul.f32 %v1128, %v1141
      %v1150 = vmul.f32 %v1129, %v1141
      %v1151 = vmul.f32 %v1130, %v1141
      %v1152 = vmul.f32 %v1131, %v1141
      %v1153 = vmul.f32 %v1132, %v1141
      %v1154 = vmul.f32 %v1133, %v1141
      %v1155 = vmul.f32 %v1134, %v1141
      %v1156 = vmul.f32 %v1135, %v1141
      %v1157 = vld [vmem:[%s8] sm:$0x1]
      %v1159 = vlaneseq
      %v1160 = vshrl.u32 %v1159, 7
      %v1161 = vsub.s32 0, %v1160
      %v1162 = vrot.slane %v1157, %v1161
      %v1164 = vadd.f32 %v1143, %v1162
      %v1165 = vadd.f32 %v1144, %v1162
      %v1166 = vadd.f32 %v1145, %v1162
      %v1167 = vadd.f32 %v1146, %v1162
      %v1168 = vadd.f32 %v1147, %v1162
      %v1169 = vadd.f32 %v1148, %v1162
      %v1170 = vadd.f32 %v1149, %v1162
      %v1171 = vadd.f32 %v1150, %v1162
      %v1172 = vadd.f32 %v1151, %v1162
      %v1173 = vadd.f32 %v1152, %v1162
      %v1174 = vadd.f32 %v1153, %v1162
      %v1175 = vadd.f32 %v1154, %v1162
      %v1176 = vadd.f32 %v1155, %v1162
      %v1177 = vadd.f32 %v1156, %v1162
      %1178 = vst [vmem:[%s334] sm:$0xff] %v1164
      %1179 = vst [vmem:[%s334 + $0x8] sm:$0xff] %v1165
      %1180 = vst [vmem:[%s334 + $0x10] sm:$0xff] %v1166
      %1181 = vst [vmem:[%s334 + $0x18] sm:$0xff] %v1167
      %1182 = vst [vmem:[%s334 + $0x20] sm:$0xff] %v1168
      %1183 = vst [vmem:[%s334 + $0x28] sm:$0xff] %v1169
      %1184 = vst [vmem:[%s334 + $0x30] sm:$0xff] %v1170
      %1185 = vst [vmem:[%s334 + $0x38] sm:$0xff] %v1171
      %1186 = vst [vmem:[%s334 + $0x40] sm:$0xff] %v1172
      %1187 = vst [vmem:[%s334 + $0x48] sm:$0xff] %v1173
      %1188 = vst [vmem:[%s334 + $0x50] sm:$0xff] %v1174
      %1189 = vst [vmem:[%s334 + $0x58] sm:$0xff] %v1175
      %1190 = vst [vmem:[%s334 + $0x60] sm:$0xff] %v1176
      %1191 = vst [vmem:[%s334 + $0x68] sm:$0xff] %v1177
      %s1192 = smul.u32 14, %s20
      %p1193 = scmp.lt.s32.totalorder %s1192, 27
      %s1194 = scalar_select %p1193, %s1192, 27
      %s1195 = smul.addr %s1194, 8
      %s1196 = scalar_lea.vmem %s9, %s1195
      // Predicated region
      $region57: #{actor_forward.1} parent=55 // pred_check
        %p1197 = pneg %p232
      $region58: #{actor_forward.1} parent=55 // pred_check_branch
        %1199 = sbr.rel (%p1197) target = $region60
      $region59: #{actor_forward.1} parent=55 // pred_region
        %s1200 = smul.u32 14, %s20
      $region60: #{actor_forward.1} parent=55 // pred_fallthru
        _
    $region56: #{actor_forward.1} parent=5 // pred_fallthru
      _
    %p1201 = scmp.le.s32.totalorder 2, %s15
    // Predicated region
    $region61: #{actor_forward.1} parent=5 // pred_check
      %p1202 = pneg %p1201
    $region62: #{actor_forward.1} parent=5 // pred_check_branch
      %1204 = sbr.rel (%p1202) target = $region64
    $region63: #{actor_forward.1} parent=5 // pred_region
      %s1205 = ssub.s32 %s15, 2
      // Predicated region
      $region65: #{actor_forward.1} parent=63 // pred_check
        %p1206 = pneg %p238
      $region66: #{actor_forward.1} parent=63 // pred_check_branch
        %1208 = sbr.rel (%p1206) target = $region68
      $region67: #{actor_forward.1} parent=63 // pred_region
        %s1209 = smul.u32 14, %s21
        %p1210 = scmp.lt.s32.totalorder %s1209, 27
        %s1211 = scalar_select %p1210, %s1209, 27
        %s1212 = smul.addr %s1211, 8
        %s1213 = scalar_lea.vmem %s9, %s1212
      $region68: #{actor_forward.1} parent=63 // pred_fallthru
        _
    $region64: #{actor_forward.1} parent=5 // pred_fallthru
      _
  $region6: #{actor_forward.1} parent=0 // loop_footer
    %s19 = sadd.s32 1, %s15
  $region7: #{actor_forward.1} parent=0 // loop_footer_branch
    %14 = sbr.rel target = $region3
  $region8: #{actor_forward.1} parent=0 // loop_exit
    _

</llo_original>
